<compile_context>
chip_gen: v5e
topology: v5e:2x2
jax: 0.10.0
libtpu: 0.0.40
codegen_flags: <defaults>
</compile_context>

<pallas_src>
import functools

import jax
import jax.numpy as jnp
import numpy as np
from jax.experimental import pallas as pl
from jax.experimental.pallas import tpu as pltpu


# ---------------------------------------------------------------------------
# Pallas kernel: fused (pointwise conv == matmul) + bias + capsule squash.
# ---------------------------------------------------------------------------
def _primary_caps_kernel(x_ref, w_ref, b_ref, g_ref, gt_ref, o_ref, *, eps):
    # x_ref : (1, Cin, TL)   input tile: channels on sublanes, length on lanes
    # w_ref : (Cout, Cin)    conv weight (Cout = num_caps * D), resident
    # b_ref : (Cout, 1)      conv bias (broadcast along lanes)
    # g_ref : (Cout, NC)     0/1 group matrix (row r belongs to capsule r // D)
    # gt_ref: (NC, Cout)     transpose of g_ref
    # o_ref : (1, Cout, TL)  squashed output tile (f32)
    x = x_ref[0]                                            # (Cin, TL)

    # pointwise Conv1d == matmul on the MXU; accumulate in f32.
    y = jnp.dot(w_ref[...], x, preferred_element_type=jnp.float32)
    y = y + b_ref[...]                                      # (Cout, TL), f32

    # per-capsule squared norm over the D rows of each capsule:
    # (NC, Cout) @ (Cout, TL) -> (NC, TL)
    sq = jnp.dot(gt_ref[...], y * y, preferred_element_type=jnp.float32)

    # squash scale = sq / (1 + sq) / (sqrt(sq) + eps); transcendental work is
    # pushed to the EUP slot (rsqrt + approximate reciprocal).
    scale = (sq
             * pl.reciprocal(1.0 + sq, approx=True)
             * jax.lax.rsqrt(sq + eps * eps))               # (NC, TL)

    # broadcast each capsule's scalar back over its D rows:
    # (Cout, NC) @ (NC, TL) -> (Cout, TL)
    scale_full = jnp.dot(g_ref[...], scale, preferred_element_type=jnp.float32)
    o_ref[0] = (scale_full * y).astype(o_ref.dtype)


# ---------------------------------------------------------------------------
# Wrapper: glue reshapes in plain JAX, hot path in Pallas.
# ---------------------------------------------------------------------------
def primary_capsule_forward(x, weight, bias, num_capsules, out_channels,
                            *, tile_l=512, eps=1e-8, operand_dtype=None):
    """x: (B, Cin, L)  |  weight: (Cout, Cin)  |  bias: (Cout,).

    Returns (B, num_capsules * L, out_channels), matching the PyTorch module.
    """
    # TODO(synk): only kernel_size=1, stride=1 (the module defaults) are implemented.
    B, Cin, L = x.shape
    Cout = num_capsules * out_channels
    assert weight.shape == (Cout, Cin)

    # Optional operand cast (off by default: a wrapper-side cast is an extra
    # un-hidden HBM pass over x and the kernel is memory-bound).
    if operand_dtype is not None and x.dtype != jnp.dtype(operand_dtype):
        x = x.astype(operand_dtype)

    # Length tile: full extent for small L, otherwise a lane-dense multiple of
    # 128 (default 512) that amortizes per-grid-step overhead.
    if L <= tile_l:
        tl, Lp = L, L
    else:
        assert tile_l % 128 == 0, "tile_l must be a multiple of 128 when tiling L"
        tl = tile_l
        Lp = pl.cdiv(L, tl) * tl

    xk = x
    if Lp != L:
        xk = jnp.pad(xk, ((0, 0), (0, 0), (0, Lp - L)))

    w = jnp.asarray(weight, xk.dtype)                        # (Cout, Cin)
    b2d = jnp.asarray(bias, jnp.float32).reshape(Cout, 1)    # (Cout, 1)

    # group matrix: output row r belongs to capsule r // out_channels
    caps_of_row = np.arange(Cout) // out_channels
    g_np = (caps_of_row[:, None] == np.arange(num_capsules)[None, :]).astype(np.float32)
    g = jnp.asarray(g_np)                                    # (Cout, NC)
    gt = jnp.asarray(g_np.T)                                 # (NC, Cout)

    kernel = functools.partial(_primary_caps_kernel, eps=eps)
    grid = (B, Lp // tl)

    itemsize = jnp.dtype(xk.dtype).itemsize
    in_bytes = int(B * Cin * Lp * itemsize + Cout * Cin * itemsize
                   + (Cout + Cout * num_capsules * 2) * 4)
    out_bytes = int(B * Cout * Lp * 4)
    cost = pl.CostEstimate(
        flops=int(2 * B * Lp * Cout * (Cin + 2 * num_capsules) + 5 * B * Lp * Cout),
        transcendentals=int(2 * B * Lp * num_capsules),
        bytes_accessed=in_bytes + out_bytes,
    )

    y = pl.pallas_call(
        kernel,
        out_shape=jax.ShapeDtypeStruct((B, Cout, Lp), jnp.float32),
        grid=grid,
        in_specs=[
            pl.BlockSpec((1, Cin, tl), lambda bi, li: (bi, 0, li)),
            pl.BlockSpec((Cout, Cin), lambda bi, li: (0, 0)),
            pl.BlockSpec((Cout, 1), lambda bi, li: (0, 0)),
            pl.BlockSpec((Cout, num_capsules), lambda bi, li: (0, 0)),
            pl.BlockSpec((num_capsules, Cout), lambda bi, li: (0, 0)),
        ],
        out_specs=pl.BlockSpec((1, Cout, tl), lambda bi, li: (bi, 0, li)),
        compiler_params=pltpu.CompilerParams(
            dimension_semantics=("parallel", "parallel")),
        cost_estimate=cost,
    )(xk, w, b2d, g, gt)

    y = y[:, :, :L]                                          # drop length padding
    # y[b, cap*D + d, l]  ->  PyTorch output (b, cap*L + l, d).  Done in XLA:
    # the final layout has D (=8) on the last dim, which would force masked
    # vst.msk stores if written from the kernel.
    y = y.reshape(B, num_capsules, out_channels, L)
    y = jnp.transpose(y, (0, 1, 3, 2)).reshape(B, num_capsules * L, out_channels)
    return y


# ---------------------------------------------------------------------------
# Pure-JAX reference (mirrors the PyTorch forward exactly) for validation.
# ---------------------------------------------------------------------------
def primary_capsule_reference(x, weight, bias, num_capsules, out_channels, eps=1e-8):
    B, Cin, L = x.shape
    out = jnp.einsum("bcl,oc->bol", x, weight) + bias[None, :, None]   # Conv1d k=1
    out = out.reshape(B, num_capsules, out_channels, L)
    out = jnp.transpose(out, (0, 1, 3, 2)).reshape(B, -1, out_channels)
    sq = jnp.sum(out ** 2, axis=-1, keepdims=True)
    return (sq / (1.0 + sq)) * out / (jnp.sqrt(sq) + eps)


if __name__ == "__main__":
    # small shapes consistent with the module: Conv1d input (B, in_channels, L)
    B, Cin, L = 2, 4, 16
    num_capsules, out_channels = 4, 8          # capsule dimension = 8
    Cout = num_capsules * out_channels

    key = jax.random.PRNGKey(0)
    kx, kw, kb = jax.random.split(key, 3)
    x = jax.random.normal(kx, (B, Cin, L), dtype=jnp.float32)
    # deterministic parameter init (Conv1d weight (Cout, Cin, 1) with k=1 -> (Cout, Cin))
    weight = 0.1 * jax.random.normal(kw, (Cout, Cin), dtype=jnp.float32)
    bias = 0.05 * jax.random.normal(kb, (Cout,), dtype=jnp.float32)

    ref = primary_capsule_reference(x, weight, bias, num_capsules, out_channels)

    # 1) default path: f32 operands DMA'd straight into the kernel.
    out_f32 = primary_capsule_forward(x, weight, bias, num_capsules, out_channels)
    out_f32 = jax.block_until_ready(out_f32)
    assert out_f32.shape == (B, num_capsules * L, out_channels), out_f32.shape
    np.testing.assert_allclose(np.asarray(out_f32), np.asarray(ref),
                               rtol=5e-3, atol=1e-5)

    # 2) optional bf16 matmul operands (f32 accumulate): looser tolerance.
    out_bf16 = primary_capsule_forward(x, weight, bias, num_capsules, out_channels,
                                       operand_dtype=jnp.bfloat16)
    out_bf16 = jax.block_until_ready(out_bf16)
    np.testing.assert_allclose(np.asarray(out_bf16), np.asarray(ref),
                               rtol=3e-2, atol=3e-3)

    # 3) exercise the tiled/padded-length path (L not a multiple of the tile).
    L2 = 300
    x2 = jax.random.normal(jax.random.PRNGKey(1), (B, Cin, L2), dtype=jnp.float32)
    ref2 = primary_capsule_reference(x2, weight, bias, num_capsules, out_channels)
    out2 = primary_capsule_forward(x2, weight, bias, num_capsules, out_channels,
                                   tile_l=128)
    out2 = jax.block_until_ready(out2)
    assert out2.shape == (B, num_capsules * L2, out_channels), out2.shape
    np.testing.assert_allclose(np.asarray(out2), np.asarray(ref2),
                               rtol=1e-2, atol=1e-4)

    print("KERNEL_OK")
</pallas_src>

<mosaic_0001>
module attributes {stable_mosaic.version = 11 : i64} {
  func.func @_primary_caps_kernel(%arg0: i32, %arg1: i32, %arg2: memref<1x4x16xf32, #tpu.memory_space<vmem>>, %arg3: memref<32x4xf32, #tpu.memory_space<vmem>>, %arg4: memref<32x1xf32, #tpu.memory_space<vmem>>, %arg5: memref<32x4xf32, #tpu.memory_space<vmem>>, %arg6: memref<4x32xf32, #tpu.memory_space<vmem>>, %arg7: memref<1x32x16xf32, #tpu.memory_space<vmem>>) attributes {dimension_semantics = [#tpu.dimension_semantics<parallel>, #tpu.dimension_semantics<parallel>], iteration_bounds = array<i64: 2, 1>, scalar_prefetch = 0 : i64, scratch_operands = 0 : i64, tpu.core_type = #tpu.core_type<tc>, window_params = [{transform_indices = @transform_0, window_bounds = array<i64: 1, 4, 16>}, {pipeline_mode = #tpu.pipeline_mode<synchronous>, transform_indices = @transform_1, window_bounds = array<i64: 32, 4>}, {pipeline_mode = #tpu.pipeline_mode<synchronous>, transform_indices = @transform_2, window_bounds = array<i64: 32, 1>}, {pipeline_mode = #tpu.pipeline_mode<synchronous>, transform_indices = @transform_3, window_bounds = array<i64: 32, 4>}, {pipeline_mode = #tpu.pipeline_mode<synchronous>, transform_indices = @transform_4, window_bounds = array<i64: 4, 32>}, {transform_indices = @transform_5, window_bounds = array<i64: 1, 32, 16>}]} {
    %c0 = arith.constant 0 : index
    %c0_0 = arith.constant 0 : index
    %c0_1 = arith.constant 0 : index
    %0 = vector.load %arg2[%c0, %c0_0, %c0_1] : memref<1x4x16xf32, #tpu.memory_space<vmem>>, vector<1x4x16xf32>
    %1 = vector.shape_cast %0 : vector<1x4x16xf32> to vector<4x16xf32>
    %c0_2 = arith.constant 0 : index
    %c0_3 = arith.constant 0 : index
    %2 = vector.load %arg3[%c0_2, %c0_3] : memref<32x4xf32, #tpu.memory_space<vmem>>, vector<32x4xf32>
    %cst = arith.constant dense<0.000000e+00> : vector<32x16xf32>
    %3 = tpu.matmul %2, %1, %cst {dimension_numbers = #tpu.dot_dimension_numbers<[1], [0], [0], [1], [0, 0, 1, 1], [], []>} : vector<32x4xf32>, vector<4x16xf32>, vector<32x16xf32> -> vector<32x16xf32>
    %c0_4 = arith.constant 0 : index
    %c0_5 = arith.constant 0 : index
    %4 = vector.load %arg4[%c0_4, %c0_5] : memref<32x1xf32, #tpu.memory_space<vmem>>, vector<32x1xf32>
    %5 = vector.broadcast %4 : vector<32x1xf32> to vector<32x16xf32>
    %6 = arith.addf %3, %5 : vector<32x16xf32>
    %c0_6 = arith.constant 0 : index
    %c0_7 = arith.constant 0 : index
    %7 = vector.load %arg6[%c0_6, %c0_7] : memref<4x32xf32, #tpu.memory_space<vmem>>, vector<4x32xf32>
    %8 = arith.mulf %6, %6 : vector<32x16xf32>
    %cst_8 = arith.constant dense<0.000000e+00> : vector<4x16xf32>
    %9 = tpu.matmul %7, %8, %cst_8 {dimension_numbers = #tpu.dot_dimension_numbers<[1], [0], [0], [1], [0, 0, 1, 1], [], []>} : vector<4x32xf32>, vector<32x16xf32>, vector<4x16xf32> -> vector<4x16xf32>
    %cst_9 = arith.constant 1.000000e+00 : f32
    %10 = vector.broadcast %cst_9 : f32 to vector<4x16xf32>
    %11 = arith.addf %10, %9 : vector<4x16xf32>
    %12 = tpu.reciprocal %11 {approx = true} : vector<4x16xf32> -> vector<4x16xf32>
    %13 = arith.mulf %9, %12 : vector<4x16xf32>
    %cst_10 = arith.constant 1.000000e-16 : f32
    %14 = vector.broadcast %cst_10 : f32 to vector<4x16xf32>
    %15 = arith.addf %9, %14 : vector<4x16xf32>
    %16 = math.rsqrt %15 : vector<4x16xf32>
    %17 = arith.mulf %13, %16 : vector<4x16xf32>
    %c0_11 = arith.constant 0 : index
    %c0_12 = arith.constant 0 : index
    %18 = vector.load %arg5[%c0_11, %c0_12] : memref<32x4xf32, #tpu.memory_space<vmem>>, vector<32x4xf32>
    %cst_13 = arith.constant dense<0.000000e+00> : vector<32x16xf32>
    %19 = tpu.matmul %18, %17, %cst_13 {dimension_numbers = #tpu.dot_dimension_numbers<[1], [0], [0], [1], [0, 0, 1, 1], [], []>} : vector<32x4xf32>, vector<4x16xf32>, vector<32x16xf32> -> vector<32x16xf32>
    %20 = arith.mulf %19, %6 : vector<32x16xf32>
    %c0_14 = arith.constant 0 : index
    %c0_15 = arith.constant 0 : index
    %c0_16 = arith.constant 0 : index
    %21 = vector.load %arg7[%c0_14, %c0_15, %c0_16] : memref<1x32x16xf32, #tpu.memory_space<vmem>>, vector<1x32x16xf32>
    %22 = vector.shape_cast %21 : vector<1x32x16xf32> to vector<32x16xf32>
    %23 = vector.shape_cast %20 : vector<32x16xf32> to vector<1x32x16xf32>
    tpu.vector_store %arg7[%c0_14, %c0_15, %c0_16], %23 {strides = array<i32>} : memref<1x32x16xf32, #tpu.memory_space<vmem>>, vector<1x32x16xf32>,
    return
  }
  func.func @transform_0(%arg0: i32, %arg1: i32) -> (i32, i32, i32) {
    %c0_i32 = arith.constant 0 : i32
    %c0_i32_0 = arith.constant 0 : i32
    return %arg0, %c0_i32, %arg1 : i32, i32, i32
  }
  func.func @transform_1(%arg0: i32, %arg1: i32) -> (i32, i32) {
    %c0_i32 = arith.constant 0 : i32
    %c0_i32_0 = arith.constant 0 : i32
    %c0_i32_1 = arith.constant 0 : i32
    return %c0_i32, %c0_i32_0 : i32, i32
  }
  func.func @transform_2(%arg0: i32, %arg1: i32) -> (i32, i32) {
    %c0_i32 = arith.constant 0 : i32
    %c0_i32_0 = arith.constant 0 : i32
    %c0_i32_1 = arith.constant 0 : i32
    return %c0_i32, %c0_i32_0 : i32, i32
  }
  func.func @transform_3(%arg0: i32, %arg1: i32) -> (i32, i32) {
    %c0_i32 = arith.constant 0 : i32
    %c0_i32_0 = arith.constant 0 : i32
    %c0_i32_1 = arith.constant 0 : i32
    return %c0_i32, %c0_i32_0 : i32, i32
  }
  func.func @transform_4(%arg0: i32, %arg1: i32) -> (i32, i32) {
    %c0_i32 = arith.constant 0 : i32
    %c0_i32_0 = arith.constant 0 : i32
    %c0_i32_1 = arith.constant 0 : i32
    return %c0_i32, %c0_i32_0 : i32, i32
  }
  func.func @transform_5(%arg0: i32, %arg1: i32) -> (i32, i32, i32) {
    %c0_i32 = arith.constant 0 : i32
    %c0_i32_0 = arith.constant 0 : i32
    return %arg0, %c0_i32, %arg1 : i32, i32, i32
  }
}

</mosaic_0001>

<llo_original>
// kernel: tpu_custom_call.1
$region0: #{tpu_custom_call.1}
  #allocation0 [shape = 'u32[]', space=smem, size = 0x4, offset = 0x4, fixed_abs, tag = 'smem constant byte address 0x4 - core index']
  #allocation1 [shape = 'u32[72,128]{1,0:T(1,128)}', space=vmem, size = 0x9000, scoped, tag = 'internal scratch']
  %s0 = inlined_call_operand.vmem [shape: f32[2,4,16], index: 0, kind: input, shape index: {}]
  %s1 = inlined_call_operand.vmem [shape: f32[32,4], index: 1, kind: input, shape index: {}]
  %s2 = inlined_call_operand.vmem [shape: f32[32,1], index: 2, kind: input, shape index: {}]
  %s3 = inlined_call_operand.vmem [shape: f32[32,4], index: 3, kind: input, shape index: {}]
  %s4 = inlined_call_operand.vmem [shape: f32[4,32], index: 4, kind: input, shape index: {}]
  %s5 = inlined_call_operand.vmem [shape: f32[2,32,16], index: 5, kind: output, shape index: {}]
  %s6 = sld [smem:[#allocation0]]
  $region53: #{tpu_custom_call.1} parent=0
    _
  %s8 = ssub.s32 1, %s6
  %s9 = scalar_select 0, %s8, %s6
  loop: start=0, step=1, limit=4
  $region2: #{tpu_custom_call.1} parent=0 // loop_pre_header
    _
  $region3: #{tpu_custom_call.1} parent=0 // loop_header
    %s11 = sphi 0, %s15
    %p12 = scmp.ge.s32.totalorder %s11, 4
    %s18 = sphi 0, %s30
    %s19 = sphi 0, %s26
    %s20 = sphi 0, %s18
    %s21 = sphi 0, %s19
    %s22 = sphi 0, %s20
    %s23 = sphi 0, %s21
    %s35 = sphi 0, %s37
    %s38 = sphi 0, %s35
    %s39 = sphi 0, %s38
    %s55 = sphi 0, %s39
    %s59 = sphi 0, %s59
    %s61 = sphi 0, %s59
    %s62 = sphi 0, %s61
    %s76 = sphi 0, %s62
    %s80 = sphi 0, %s80
    %s82 = sphi 0, %s80
    %s83 = sphi 0, %s82
    %s97 = sphi 0, %s83
    %s101 = sphi 0, %s101
    %s103 = sphi 0, %s101
    %s104 = sphi 0, %s103
    %s118 = sphi 0, %s104
    %s122 = sphi 0, %s122
    %s124 = sphi 0, %s122
    %s125 = sphi 0, %s124
    %s139 = sphi 0, %s125
    %s147 = sphi 0, %s149
    %s150 = sphi 0, %s147
    %s151 = sphi 0, %s150
    %s167 = sphi 0, %s151
  $region4: #{tpu_custom_call.1} parent=0 // loop_header_branch
    %14 = sbr.rel (%p12) target = $region8
  $region5: #{tpu_custom_call.1} parent=0 // loop_body
    %s16 = ssub.s32 %s11, 1
    %s17 = ssub.s32 %s11, 2
    %s24 = sadd.s32 1, %s19
    %p25 = scmp.ge.s32.totalorder %s24, 1
    %s26 = scalar_select %p25, 0, %s24
    %s27 = sadd.s32 1, %s18
    %s28 = scalar_select %p25, %s27, %s18
    %p29 = scmp.ge.s32.totalorder %s28, 2
    %s30 = scalar_select %p29, 0, %s28
    %s31 = ssub.s32 %s18, %s30
    %s32 = ssub.s32 %s19, %s26
    %s33 = sor.u32 %s31, %s32
    %p34 = scmp.eq.s32.totalorder %s33, 0
    %s36 = sadd.s32 %s35, 1
    %s37 = scalar_select %p34, %s35, %s36
    %p40 = pneg %p34
    %p41 = scmp.eq.s32.totalorder %s11, 1
    %p42 = por %p40, %p41
    %p43 = scmp.ne.s32.totalorder %s35, %s38
    %p44 = scmp.eq.s32.totalorder %s11, 0
    %p45 = por %p43, %p44
    %p46 = scmp.ne.s32.totalorder %s35, %s38
    %p47 = scmp.eq.s32.totalorder %s16, 1
    %p48 = por %p46, %p47
    %p49 = scmp.ne.s32.totalorder %s38, %s39
    %p50 = scmp.eq.s32.totalorder %s16, 0
    %p51 = por %p49, %p50
    %p52 = scmp.ne.s32.totalorder %s38, %s39
    %p53 = scmp.eq.s32.totalorder %s17, 1
    %p54 = por %p52, %p53
    %p56 = scmp.ne.s32.totalorder %s39, %s55
    %p57 = scmp.eq.s32.totalorder %s17, 0
    %p58 = por %p56, %p57
    %s60 = sadd.s32 %s59, 1
    %p63 = scmp.eq.s32.totalorder %s11, 1
    %p64 = scmp.ne.s32.totalorder %s59, %s61
    %p65 = scmp.eq.s32.totalorder %s11, 0
    %p66 = por %p64, %p65
    %p67 = scmp.ne.s32.totalorder %s59, %s61
    %p68 = scmp.eq.s32.totalorder %s16, 1
    %p69 = por %p67, %p68
    %p70 = scmp.ne.s32.totalorder %s61, %s62
    %p71 = scmp.eq.s32.totalorder %s16, 0
    %p72 = por %p70, %p71
    %p73 = scmp.ne.s32.totalorder %s61, %s62
    %p74 = scmp.eq.s32.totalorder %s17, 1
    %p75 = por %p73, %p74
    %p77 = scmp.ne.s32.totalorder %s62, %s76
    %p78 = scmp.eq.s32.totalorder %s17, 0
    %p79 = por %p77, %p78
    %s81 = sadd.s32 %s80, 1
    %p84 = scmp.eq.s32.totalorder %s11, 1
    %p85 = scmp.ne.s32.totalorder %s80, %s82
    %p86 = scmp.eq.s32.totalorder %s11, 0
    %p87 = por %p85, %p86
    %p88 = scmp.ne.s32.totalorder %s80, %s82
    %p89 = scmp.eq.s32.totalorder %s16, 1
    %p90 = por %p88, %p89
    %p91 = scmp.ne.s32.totalorder %s82, %s83
    %p92 = scmp.eq.s32.totalorder %s16, 0
    %p93 = por %p91, %p92
    %p94 = scmp.ne.s32.totalorder %s82, %s83
    %p95 = scmp.eq.s32.totalorder %s17, 1
    %p96 = por %p94, %p95
    %p98 = scmp.ne.s32.totalorder %s83, %s97
    %p99 = scmp.eq.s32.totalorder %s17, 0
    %p100 = por %p98, %p99
    %s102 = sadd.s32 %s101, 1
    %p105 = scmp.eq.s32.totalorder %s11, 1
    %p106 = scmp.ne.s32.totalorder %s101, %s103
    %p107 = scmp.eq.s32.totalorder %s11, 0
    %p108 = por %p106, %p107
    %p109 = scmp.ne.s32.totalorder %s101, %s103
    %p110 = scmp.eq.s32.totalorder %s16, 1
    %p111 = por %p109, %p110
    %p112 = scmp.ne.s32.totalorder %s103, %s104
    %p113 = scmp.eq.s32.totalorder %s16, 0
    %p114 = por %p112, %p113
    %p115 = scmp.ne.s32.totalorder %s103, %s104
    %p116 = scmp.eq.s32.totalorder %s17, 1
    %p117 = por %p115, %p116
    %p119 = scmp.ne.s32.totalorder %s104, %s118
    %p120 = scmp.eq.s32.totalorder %s17, 0
    %p121 = por %p119, %p120
    %s123 = sadd.s32 %s122, 1
    %p126 = scmp.eq.s32.totalorder %s11, 1
    %p127 = scmp.ne.s32.totalorder %s122, %s124
    %p128 = scmp.eq.s32.totalorder %s11, 0
    %p129 = por %p127, %p128
    %p130 = scmp.ne.s32.totalorder %s122, %s124
    %p131 = scmp.eq.s32.totalorder %s16, 1
    %p132 = por %p130, %p131
    %p133 = scmp.ne.s32.totalorder %s124, %s125
    %p134 = scmp.eq.s32.totalorder %s16, 0
    %p135 = por %p133, %p134
    %p136 = scmp.ne.s32.totalorder %s124, %s125
    %p137 = scmp.eq.s32.totalorder %s17, 1
    %p138 = por %p136, %p137
    %p140 = scmp.ne.s32.totalorder %s125, %s139
    %p141 = scmp.eq.s32.totalorder %s17, 0
    %p142 = por %p140, %p141
    %s143 = ssub.s32 %s18, %s30
    %s144 = ssub.s32 %s19, %s26
    %s145 = sor.u32 %s143, %s144
    %p146 = scmp.eq.s32.totalorder %s145, 0
    %s148 = sadd.s32 %s147, 1
    %s149 = scalar_select %p146, %s147, %s148
    %p152 = pneg %p146
    %p153 = scmp.eq.s32.totalorder %s11, 1
    %p154 = por %p152, %p153
    %p155 = scmp.ne.s32.totalorder %s147, %s150
    %p156 = scmp.eq.s32.totalorder %s11, 0
    %p157 = por %p155, %p156
    %p158 = scmp.ne.s32.totalorder %s147, %s150
    %p159 = scmp.eq.s32.totalorder %s16, 1
    %p160 = por %p158, %p159
    %p161 = scmp.ne.s32.totalorder %s150, %s151
    %p162 = scmp.eq.s32.totalorder %s16, 0
    %p163 = por %p161, %p162
    %p164 = scmp.ne.s32.totalorder %s150, %s151
    %p165 = scmp.eq.s32.totalorder %s17, 1
    %p166 = por %p164, %p165
    %p168 = scmp.ne.s32.totalorder %s151, %s167
    %p169 = scmp.eq.s32.totalorder %s17, 0
    %p170 = por %p168, %p169
    %p171 = scmp.le.s32.totalorder 1, %s11
    %p172 = scmp.lt.s32.totalorder %s11, 3
    %p173 = pnand %p171, %p172
    %p174 = pneg %p173
    // Predicated region
    $region9: #{tpu_custom_call.1} parent=5 // pred_check
      _
    $region10: #{tpu_custom_call.1} parent=5 // pred_check_branch
      %176 = sbr.rel (%p173) target = $region12
    $region11: #{tpu_custom_call.1} parent=5 // pred_region
      %s177 = ssub.s32 %s11, 1
      // Predicated region
      $region13: #{tpu_custom_call.1} parent=11 // pred_check
        %p178 = pneg %p72
      $region14: #{tpu_custom_call.1} parent=11 // pred_check_branch
        %180 = sbr.rel (%p178) target = $region16
      $region15: #{tpu_custom_call.1} parent=11 // pred_region
        _
      $region16: #{tpu_custom_call.1} parent=11 // pred_fallthru
        _
      // Predicated region
      $region17: #{tpu_custom_call.1} parent=11 // pred_check
        %p181 = pneg %p93
      $region18: #{tpu_custom_call.1} parent=11 // pred_check_branch
        %183 = sbr.rel (%p181) target = $region20
      $region19: #{tpu_custom_call.1} parent=11 // pred_region
        _
      $region20: #{tpu_custom_call.1} parent=11 // pred_fallthru
        _
      // Predicated region
      $region21: #{tpu_custom_call.1} parent=11 // pred_check
        %p184 = pneg %p114
      $region22: #{tpu_custom_call.1} parent=11 // pred_check_branch
        %186 = sbr.rel (%p184) target = $region24
      $region23: #{tpu_custom_call.1} parent=11 // pred_region
        _
      $region24: #{tpu_custom_call.1} parent=11 // pred_fallthru
        _
      // Predicated region
      $region25: #{tpu_custom_call.1} parent=11 // pred_check
        %p187 = pneg %p135
      $region26: #{tpu_custom_call.1} parent=11 // pred_check_branch
        %189 = sbr.rel (%p187) target = $region28
      $region27: #{tpu_custom_call.1} parent=11 // pred_region
        _
      $region28: #{tpu_custom_call.1} parent=11 // pred_fallthru
        _
    $region12: #{tpu_custom_call.1} parent=5 // pred_fallthru
      _
    %p190 = scmp.lt.s32.totalorder %s11, 2
    // Predicated region
    $region29: #{tpu_custom_call.1} parent=5 // pred_check
      %p191 = pneg %p190
    $region30: #{tpu_custom_call.1} parent=5 // pred_check_branch
      %193 = sbr.rel (%p191) target = $region32
    $region31: #{tpu_custom_call.1} parent=5 // pred_region
      // Predicated region
      $region33: #{tpu_custom_call.1} parent=31 // pred_check
        %p194 = pneg %p45
      $region34: #{tpu_custom_call.1} parent=31 // pred_check_branch
        %196 = sbr.rel (%p194) target = $region36
      $region35: #{tpu_custom_call.1} parent=31 // pred_region
        %p197 = scmp.lt.s32.totalorder %s18, 1
        %s198 = scalar_select %p197, %s18, 1
        %p199 = scmp.lt.s32.totalorder %s19, 0
        %s200 = scalar_select %p199, %s19, 0
        %s201 = sadd.s32 %s200, %s198
        %s202 = smul.addr %s201, 4
        %s203 = scalar_lea.vmem %s0, %s202
      $region36: #{tpu_custom_call.1} parent=31 // pred_fallthru
        _
    $region32: #{tpu_custom_call.1} parent=5 // pred_fallthru
      _
    %p204 = scmp.le.s32.totalorder 1, %s11
    %p205 = scmp.lt.s32.totalorder %s11, 3
    %p206 = pnand %p204, %p205
    %p207 = pneg %p206
    // Predicated region
    $region37: #{tpu_custom_call.1} parent=5 // pred_check
      _
    $region38: #{tpu_custom_call.1} parent=5 // pred_check_branch
      %209 = sbr.rel (%p206) target = $region40
    $region39: #{tpu_custom_call.1} parent=5 // pred_region
      %s210 = ssub.s32 %s11, 1
      %p211 = scmp.lt.s32.totalorder %s20, 1
      %s212 = scalar_select %p211, %s20, 1
      %p213 = scmp.lt.s32.totalorder %s21, 0
      %s214 = scalar_select %p213, %s21, 0
      %s215 = sadd.s32 %s214, %s212
      %s216 = smul.addr %s215, 4
      %s217 = scalar_lea.vmem %s0, %s216
      %p218 = pneg %p51
      %p219 = pneg %p48
      %p220 = pneg %p72
      %p221 = pneg %p69
      %p222 = pneg %p93
      %p223 = pneg %p90
      %p224 = pneg %p114
      %p225 = pneg %p111
      %p226 = pneg %p135
      %p227 = pneg %p132
      %p228 = pneg %p163
      %p229 = pneg %p160
      %p230 = scmp.lt.s32.totalorder %s20, 1
      %s231 = scalar_select %p230, %s20, 1
      %p232 = scmp.lt.s32.totalorder %s21, 0
      %s233 = scalar_select %p232, %s21, 0
      %s234 = smul.addr %s231, 4
      %s235 = sadd.s32 %s233, %s234
      %s236 = smul.addr %s235, 8
      %s237 = scalar_lea.vmem %s5, %s236
      %p238 = scmp.lt.s32.totalorder %s20, 1
      %s239 = scalar_select %p238, %s20, 1
      %p240 = scmp.lt.s32.totalorder %s21, 0
      %s241 = scalar_select %p240, %s21, 0
      %s242 = sadd.s32 %s241, %s239
      %s243 = smul.addr %s242, 4
      %s244 = scalar_lea.vmem %s0, %s243
      %p245 = scmp.lt.s32.totalorder %s20, 1
      %s246 = scalar_select %p245, %s20, 1
      %p247 = scmp.lt.s32.totalorder %s21, 0
      %s248 = scalar_select %p247, %s21, 0
      %s249 = smul.addr %s246, 4
      %s250 = sadd.s32 %s248, %s249
      %s251 = smul.addr %s250, 8
      %s252 = scalar_lea.vmem %s5, %s251
      %v253 = vld [vmem:[%s244] sm:$0xf]
      %v254 = vld [vmem:[%s1] sm:$0xff]
      %v255 = vld [vmem:[%s1 + $0x8] sm:$0xff]
      %v256 = vld [vmem:[%s1 + $0x10] sm:$0xff]
      %v257 = vld [vmem:[%s1 + $0x18] sm:$0xff]
      %v258 = vld [vmem:[%s2] sm:$0xff]
      %v259 = vld [vmem:[%s2 + $0x8] sm:$0xff]
      %v260 = vld [vmem:[%s2 + $0x10] sm:$0xff]
      %v261 = vld [vmem:[%s2 + $0x18] sm:$0xff]
      %263 = vset.pattern.permute.xlu0 0
      %264 = vperm.xlu0 %263, %v258
      %v265 = vpop.permute.xlu0 %264
      %268 = vset.pattern.permute.xlu0 0
      %269 = vperm.xlu0 %268, %v259
      %v270 = vpop.permute.xlu0 %269
      %273 = vset.pattern.permute.xlu0 0
      %274 = vperm.xlu0 %273, %v260
      %v275 = vpop.permute.xlu0 %274
      %278 = vset.pattern.permute.xlu0 0
      %279 = vperm.xlu0 %278, %v261
      %v280 = vpop.permute.xlu0 %279
      %vm282 = vcmask 31744
      %v284 = vsel %vm282, %v254, 0
      %v287 = vsel %vm282, %v255, 0
      %v290 = vsel %vm282, %v256, 0
      %v293 = vsel %vm282, %v257, 0
      %vm295 = vcmask 1043456
      %v297 = vsel %vm295, %v253, 0
      %299 = vmatpush.msra.mxu0 0.0
      %300 = vmatpush.msra.mxu0 0.0
      %301 = vmatpush.msra.mxu0 0.0
      %302 = vmatpush.msra.mxu0 0.0
      %303 = vmatpush.msra.mxu0 0.0
      %304 = vmatpush.msra.mxu0 0.0
      %305 = vmatpush.msra.mxu0 0.0
      %306 = vmatpush.msra.mxu0 0.0
      %307 = vmatpush.msra.mxu0 0.0
      %308 = vmatpush.msra.mxu0 0.0
      %309 = vmatpush.msra.mxu0 0.0
      %310 = vmatpush.msra.mxu0 0.0
      %311 = vmatpush.msra.mxu0 0.0
      %312 = vmatpush.msra.mxu0 0.0
      %313 = vmatpush.msra.mxu0 0.0
      %314 = vmatpush.msra.mxu0 %v297
      %315 = vmatmul.f32.gmra.mxu0 %v284
      %v316 = vpop.f32.mrf.mxu0
      %v317 = vadd.f32 %v265, %v316
      %318 = vmatmul.f32.gmra.mxu0 %v287
      %v319 = vpop.f32.mrf.mxu0
      %v320 = vadd.f32 %v270, %v319
      %321 = vmatmul.f32.gmra.mxu0 %v290
      %v322 = vpop.f32.mrf.mxu0
      %v323 = vadd.f32 %v275, %v322
      %324 = vmatmul.f32.gmra.mxu0 %v293
      %v325 = vpop.f32.mrf.mxu0
      %v326 = vadd.f32 %v280, %v325
      %327 = vdwg.mxu0
      %v328 = vld [vmem:[%s4] sm:$0xf]
      %v329 = vmul.f32 %v317, %v317
      %v330 = vmul.f32 %v320, %v320
      %v331 = vmul.f32 %v323, %v323
      %v332 = vmul.f32 %v326, %v326
      %vm333 = vcmask 261120
      %v335 = vsel %vm333, %v328, 0
      %337 = vmatpush.msra.mxu0 0.0
      %338 = vmatpush.msra.mxu0 0.0
      %339 = vmatpush.msra.mxu0 0.0
      %340 = vmatpush.msra.mxu0 0.0
      %341 = vmatpush.msra.mxu0 0.0
      %342 = vmatpush.msra.mxu0 0.0
      %343 = vmatpush.msra.mxu0 0.0
      %344 = vmatpush.msra.mxu0 0.0
      %345 = vmatpush.msra.mxu0 0.0
      %346 = vmatpush.msra.mxu0 0.0
      %347 = vmatpush.msra.mxu0 0.0
      %348 = vmatpush.msra.mxu0 0.0
      %349 = vmatpush.msra.mxu0 %v332
      %350 = vmatpush.msra.mxu0 %v331
      %351 = vmatpush.msra.mxu0 %v330
      %352 = vmatpush.msra.mxu0 %v329
      %353 = vmatmul.f32.gmra.mxu0 %v335
      %v354 = vpop.f32.mrf.mxu0
      %v355 = vadd.f32 0.0, %v354
      %356 = vdwg.mxu0
      %v357 = vadd.f32 %v355, 1.0
      %v358 = vrcp.pop %v357
      %v359 = vmul.f32 %v355, %v358
      %v360 = vadd.f32 %v355, 1e-16
      %v361 = vrsqrt.pop %v360
      %v362 = vmul.f32 %v361, %v360
      %v363 = vmul.f32 %v362, %v361
      %v364 = vmul.f32 0.5, %v363
      %v365 = vsub.f32 1.5, %v364
      %v366 = vmul.f32 %v361, %v365
      %vm367 = vweird.f32 %v360
      %vm368 = vweird.f32 %v361
      %vm369 = vmor %vm367, %vm368
      %v370 = vsel %vm369, %v361, %v366
      %v371 = vmul.f32 %v359, %v370
      %v372 = vld [vmem:[%s3] sm:$0xff]
      %v373 = vld [vmem:[%s3 + $0x8] sm:$0xff]
      %v374 = vld [vmem:[%s3 + $0x10] sm:$0xff]
      %v375 = vld [vmem:[%s3 + $0x18] sm:$0xff]
      %v377 = vsel %vm282, %v372, 0
      %v380 = vsel %vm282, %v373, 0
      %v383 = vsel %vm282, %v374, 0
      %v386 = vsel %vm282, %v375, 0
      %v389 = vsel %vm295, %v371, 0
      %391 = vmatpush.msra.mxu0 0.0
      %392 = vmatpush.msra.mxu0 0.0
      %393 = vmatpush.msra.mxu0 0.0
      %394 = vmatpush.msra.mxu0 0.0
      %395 = vmatpush.msra.mxu0 0.0
      %396 = vmatpush.msra.mxu0 0.0
      %397 = vmatpush.msra.mxu0 0.0
      %398 = vmatpush.msra.mxu0 0.0
      %399 = vmatpush.msra.mxu0 0.0
      %400 = vmatpush.msra.mxu0 0.0
      %401 = vmatpush.msra.mxu0 0.0
      %402 = vmatpush.msra.mxu0 0.0
      %403 = vmatpush.msra.mxu0 0.0
      %404 = vmatpush.msra.mxu0 0.0
      %405 = vmatpush.msra.mxu0 0.0
      %406 = vmatpush.msra.mxu0 %v389
      %407 = vmatmul.f32.gmra.mxu0 %v377
      %v408 = vpop.f32.mrf.mxu0
      %v409 = vadd.f32 0.0, %v408
      %410 = vmatmul.f32.gmra.mxu0 %v380
      %v411 = vpop.f32.mrf.mxu0
      %v412 = vadd.f32 0.0, %v411
      %413 = vmatmul.f32.gmra.mxu0 %v383
      %v414 = vpop.f32.mrf.mxu0
      %v415 = vadd.f32 0.0, %v414
      %416 = vmatmul.f32.gmra.mxu0 %v386
      %v417 = vpop.f32.mrf.mxu0
      %v418 = vadd.f32 0.0, %v417
      %419 = vdwg.mxu0
      %v420 = vmul.f32 %v409, %v317
      %v421 = vmul.f32 %v412, %v320
      %v422 = vmul.f32 %v415, %v323
      %v423 = vmul.f32 %v418, %v326
      %vm424 = vcmask 130048
      %425 = vst.msk [vmem:[%s252] sm:$0xff] %vm424, %v420
      %426 = vst.msk [vmem:[%s252 + $0x8] sm:$0xff] %vm424, %v421
      %427 = vst.msk [vmem:[%s252 + $0x10] sm:$0xff] %vm424, %v422
      %428 = vst.msk [vmem:[%s252 + $0x18] sm:$0xff] %vm424, %v423
      %p429 = scmp.lt.s32.totalorder %s20, 1
      %s430 = scalar_select %p429, %s20, 1
      %p431 = scmp.lt.s32.totalorder %s21, 0
      %s432 = scalar_select %p431, %s21, 0
      %s433 = smul.addr %s430, 4
      %s434 = sadd.s32 %s432, %s433
      %s435 = smul.addr %s434, 8
      %s436 = scalar_lea.vmem %s5, %s435
      // Predicated region
      $region41: #{tpu_custom_call.1} parent=39 // pred_check
        %p437 = pneg %p160
      $region42: #{tpu_custom_call.1} parent=39 // pred_check_branch
        %439 = sbr.rel (%p437) target = $region44
      $region43: #{tpu_custom_call.1} parent=39 // pred_region
        _
      $region44: #{tpu_custom_call.1} parent=39 // pred_fallthru
        _
    $region40: #{tpu_custom_call.1} parent=5 // pred_fallthru
      _
    %p440 = scmp.le.s32.totalorder 2, %s11
    // Predicated region
    $region45: #{tpu_custom_call.1} parent=5 // pred_check
      %p441 = pneg %p440
    $region46: #{tpu_custom_call.1} parent=5 // pred_check_branch
      %443 = sbr.rel (%p441) target = $region48
    $region47: #{tpu_custom_call.1} parent=5 // pred_region
      %s444 = ssub.s32 %s11, 2
      // Predicated region
      $region49: #{tpu_custom_call.1} parent=47 // pred_check
        %p445 = pneg %p166
      $region50: #{tpu_custom_call.1} parent=47 // pred_check_branch
        %447 = sbr.rel (%p445) target = $region52
      $region51: #{tpu_custom_call.1} parent=47 // pred_region
        %p448 = scmp.lt.s32.totalorder %s22, 1
        %s449 = scalar_select %p448, %s22, 1
        %p450 = scmp.lt.s32.totalorder %s23, 0
        %s451 = scalar_select %p450, %s23, 0
        %s452 = smul.addr %s449, 4
        %s453 = sadd.s32 %s451, %s452
        %s454 = smul.addr %s453, 8
        %s455 = scalar_lea.vmem %s5, %s454
      $region52: #{tpu_custom_call.1} parent=47 // pred_fallthru
        _
    $region48: #{tpu_custom_call.1} parent=5 // pred_fallthru
      _
  $region6: #{tpu_custom_call.1} parent=0 // loop_footer
    %s15 = sadd.s32 1, %s11
  $region7: #{tpu_custom_call.1} parent=0 // loop_footer_branch
    %10 = sbr.rel target = $region3
  $region8: #{tpu_custom_call.1} parent=0 // loop_exit
    _

</llo_original>
